<compile_context>
chip_gen: v7x
topology: tpu7x:2x2x1
jax: 0.10.0
libtpu: 0.0.40
codegen_flags: <defaults>
</compile_context>

<pallas_src>
import functools

import jax
import jax.numpy as jnp
from jax.experimental import pallas as pl
from jax.experimental.pallas import tpu as pltpu


def _round_up(v, m):
    return ((v + m - 1) // m) * m


def _acos(x):
    """arccos via Abramowitz & Stegun 4.4.45 (|err| <= 6.7e-5 rad); expects |x| <= 1."""
    xa = jnp.abs(x)
    poly = 1.5707288 + xa * (-0.2121144 + xa * (0.0742610 + xa * (-0.0187293)))
    r = jnp.sqrt(1.0 - xa) * poly                    # 1 - xa >= 0: ratio pre-clipped
    return jnp.where(x < 0.0, jnp.float32(jnp.pi) - r, r)


def _entailment_kernel(x_ref, pT_ref, labels_ref, np2_ref, den2_ref, psi_ref,
                       out_ref, *, gamma, b_actual, c_actual, tb):
    i = pl.program_id(0)

    x = x_ref[...]                  # [TB, Dp] streamed, native dtype (f32 / bf16)
    pT = pT_ref[...]                # [Dp, Cp] resident (constant block index)
    labels = labels_ref[...]        # [TB, 1]  int32
    np2 = np2_ref[...]              # [1, Cp]  ||p_j||^2            (0 on padded cols)
    den2 = den2_ref[...]            # [1, Cp]  (||p_j||*dist_j)^2   (1 on padded cols)
    psi = psi_ref[...]              # [1, Cp]  asin(K(1-||p||^2)/||p||)  (0 padded)

    # Pairwise dots on the MXU; RHS contracted along its LEADING dim (native layout,
    # no in-kernel transpose of p).
    dot = jax.lax.dot_general(x, pT, (((1,), (0,)), ((), ())),
                              preferred_element_type=jnp.float32)     # [TB, Cp]
    xf = x.astype(jnp.float32)
    nx2 = jnp.sum(xf * xf, axis=1, keepdims=True)                     # [TB, 1]

    num = dot * (1.0 + np2) - np2 * (1.0 + nx2)                       # [TB, Cp]
    s = 1.0 + np2 * nx2 - 2.0 * dot                                   # [TB, Cp] >= 0
    # den = norm_p * dist * sqrt(s)  =>  1/den = rsqrt(den2 * s)  (single EUP op)
    ratio = jnp.clip(num * jax.lax.rsqrt(den2 * s), -1.0, 1.0)        # guard acos
    angles = jnp.maximum(0.0, _acos(ratio) - psi)                     # [TB, Cp]

    tb_, cp_ = angles.shape
    col = jax.lax.broadcasted_iota(jnp.int32, (tb_, cp_), 1)
    # Fused positive / hinge path: label column contributes angles, every other
    # (valid) column contributes relu(gamma - angles).
    contrib = jnp.where(col == labels, angles,
                        jnp.maximum(0.0, gamma - angles))             # [TB, Cp]

    row = i * tb + jax.lax.broadcasted_iota(jnp.int32, (tb_, 1), 0)   # [TB, 1]
    mask = jnp.logical_and(col < c_actual, row < b_actual)            # kill padding
    tile_sum = jnp.sum(jnp.where(mask, contrib, 0.0), keepdims=True)  # [1, 1]

    @pl.when(i == 0)
    def _():
        out_ref[...] = jnp.zeros_like(out_ref)

    out_ref[...] += tile_sum        # raw sum; 1/B applied once in the wrapper


def _vmem_budget_and_cap():
    """Per-generation (VMEM budget bytes, max batch-tile rows)."""
    try:
        kind = jax.devices()[0].device_kind.lower()
    except Exception:
        kind = ""
    if "v7" in kind:                                  # 64 MiB physical per TC
        return 40 * 1024 * 1024, 1024
    if ("v6" in kind) or ("v5" in kind):              # 128 MiB physical
        return 96 * 1024 * 1024, 2048
    return 32 * 1024 * 1024, 1024                     # unknown: stay conservative


def _pick_tb(Dp, Cp, x_itemsize, budget):
    """Largest TB whose pipeline footprint fits ~75% of the VMEM budget."""
    fixed = 2 * Dp * Cp * x_itemsize + 2 * 3 * Cp * 4 + (64 << 10)   # p (<=2 bufs) + consts
    per_row = 2 * Dp * x_itemsize + 2 * 4 + 8 * Cp * 4               # x/labels bufs + temporaries
    avail = max(int(0.75 * budget) - fixed, 0)
    return int(avail // per_row) if per_row else 8


def entailment_loss(x, p, labels, K=0.1, gamma=1.0, block_b=None):
    B, D = x.shape
    C = p.shape[0]

    # Stream x in its native dtype when it is bf16 (halves HBM bytes, 2x MXU rate).
    stream_dtype = x.dtype if x.dtype == jnp.bfloat16 else jnp.float32
    x_f32 = x.astype(jnp.float32)
    p_f32 = p.astype(jnp.float32)

    # --- lane / contraction padding: C and D -> multiples of 128 ---
    Cp = _round_up(C, 128)
    Dp = _round_up(D, 128)

    # --- adaptive batch tile, per-generation VMEM budget ---
    budget, tb_cap = _vmem_budget_and_cap()
    if block_b is not None:
        tb_cap = int(block_b)
    TB = _pick_tb(Dp, Cp, jnp.dtype(stream_dtype).itemsize, budget)
    TB = max(8, min(TB, tb_cap, _round_up(B, 8)))
    TB = (TB // 256) * 256 if TB >= 256 else (TB // 8) * 8            # MXU / sublane quanta
    TB = max(TB, 8)
    Bp = _round_up(B, TB)
    grid = Bp // TB

    # --- streamed / resident operands (padded, lane-dense, p pre-transposed) ---
    x_pad = jnp.pad(x.astype(stream_dtype), ((0, Bp - B), (0, Dp - D)))
    pT_pad = jnp.pad(p_f32.T.astype(stream_dtype), ((0, Dp - D), (0, Cp - C)))
    labels2d = jnp.pad(labels.reshape(B, 1).astype(jnp.int32), ((0, Bp - B), (0, 0)))

    # --- p-only / batch-global quantities hoisted out of the per-tile loop ---
    np2 = jnp.sum(p_f32 * p_f32, axis=1, keepdims=True).T             # [1, C]
    norm_p = jnp.sqrt(np2)
    x_colsum = jnp.sum(x_f32, axis=0, keepdims=True)                  # [1, D]
    sum_nx2 = jnp.sum(x_f32 * x_f32)
    #   sum_b ||x_b - p_j||^2 = sum_b||x_b||^2 + B*||p_j||^2 - 2<sum_b x_b, p_j>
    dist2 = sum_nx2 + B * np2 - 2.0 * (x_colsum @ p_f32.T)            # [1, C]
    den2 = np2 * dist2                                                # [1, C]
    psi = jnp.arcsin(K * (1.0 - np2) / norm_p)                        # [1, C]

    # Padded classes get finite, harmless values (and are masked out in-kernel).
    np2_p = jnp.pad(np2, ((0, 0), (0, Cp - C)))
    den2_p = jnp.pad(den2, ((0, 0), (0, Cp - C)), constant_values=1.0)
    psi_p = jnp.pad(psi, ((0, 0), (0, Cp - C)))

    kernel = functools.partial(_entailment_kernel, gamma=float(gamma),
                               b_actual=B, c_actual=C, tb=TB)

    def _resident(shape, single_buffer):
        idx = lambda i: (0,) * len(shape)
        if single_buffer:
            # Constant block index: double-buffering would just double VMEM.
            return pl.BlockSpec(shape, idx, pipeline_mode=pl.Buffered(1))
        return pl.BlockSpec(shape, idx)

    def _run(single_buffer):
        in_specs = [
            pl.BlockSpec((TB, Dp), lambda i: (i, 0)),     # x, streamed
            _resident((Dp, Cp), single_buffer),           # p^T, resident
            pl.BlockSpec((TB, 1), lambda i: (i, 0)),      # labels, streamed
            _resident((1, Cp), single_buffer),            # ||p||^2
            _resident((1, Cp), single_buffer),            # (||p||*dist)^2
            _resident((1, Cp), single_buffer),            # psi
        ]
        return pl.pallas_call(
            kernel,
            grid=(grid,),
            in_specs=in_specs,
            out_specs=pl.BlockSpec((1, 1), lambda i: (0, 0)),
            out_shape=jax.ShapeDtypeStruct((1, 1), jnp.float32),
            compiler_params=pltpu.CompilerParams(
                # Output block is revisited across the batch-tile axis (reduction).
                dimension_semantics=("arbitrary",),
                vmem_limit_bytes=budget,
            ),
        )(x_pad, pT_pad, labels2d, np2_p, den2_p, psi_p)

    try:
        loss = _run(True)      # single-buffer the constant-index inputs
    except Exception:
        loss = _run(False)     # fallback if this JAX rejects pipeline_mode/Buffered(1)

    return loss[0, 0] / B


def reference_loss(x, p, labels, K=0.1, gamma=1.0):
    """Pure-JAX transcription of the PyTorch module (for verification)."""
    new_x = x[:, None, :]
    new_p = p[None, :, :]
    dot_prod = jnp.sum(new_x * new_p, axis=-1)                           # [B, C]
    norm_x = jnp.linalg.norm(x, axis=1, keepdims=True)                   # [B, 1]
    norm_p = jnp.linalg.norm(p, axis=1, keepdims=True).T                 # [1, C]
    num = dot_prod * (1 + norm_p**2) - norm_p**2 * (1 + norm_x**2)
    dist = jnp.sqrt(jnp.sum(jnp.sum((new_x - new_p) ** 2, axis=-1), axis=0))
    den = norm_p * dist * jnp.sqrt(1 + norm_p**2 * norm_x**2 - 2 * dot_prod)
    angle = jnp.arccos(num / den)

    p_norm = jnp.linalg.norm(p, axis=1, keepdims=True)
    psi = jnp.arcsin(K * (1 - p_norm**2) / p_norm).T                     # [1, C]

    angles = jnp.maximum(0.0, angle - psi)
    B, C = angles.shape
    onehot = jax.nn.one_hot(labels, C, dtype=angles.dtype)
    positive = jnp.sum(angles * onehot, axis=1)
    negative = jnp.sum(jnp.maximum(0.0, gamma - angles) * (1 - onehot), axis=1)
    return jnp.mean(positive + negative)


if __name__ == "__main__":
    key = jax.random.PRNGKey(0)
    kx, kp, kl = jax.random.split(key, 3)

    B, C, D = 8, 4, 32
    # Embeddings inside the Poincare ball (norms < 1) so asin/acos args are sane.
    x = jax.random.normal(kx, (B, D), jnp.float32)
    x = 0.6 * x / jnp.linalg.norm(x, axis=1, keepdims=True)
    p = jax.random.normal(kp, (C, D), jnp.float32)
    p = 0.8 * p / jnp.linalg.norm(p, axis=1, keepdims=True)
    labels = jax.random.randint(kl, (B,), 0, C, dtype=jnp.int32)

    out = entailment_loss(x, p, labels, K=0.1, gamma=1.0)
    out = jax.block_until_ready(out)

    ref = reference_loss(x, p, labels, K=0.1, gamma=1.0)
    if not bool(jnp.allclose(out, ref, rtol=3e-2, atol=3e-2, equal_nan=True)):
        raise AssertionError(f"mismatch: kernel={out} ref={ref}")

    print("KERNEL_OK")
</pallas_src>

<mosaic_0001>
module attributes {stable_mosaic.version = 11 : i64} {
  func.func @_entailment_kernel(%arg0: i32, %arg1: memref<8x128xf32, #tpu.memory_space<vmem>>, %arg2: memref<128x128xf32, #tpu.memory_space<vmem>>, %arg3: memref<8x1xi32, #tpu.memory_space<vmem>>, %arg4: memref<1x128xf32, #tpu.memory_space<vmem>>, %arg5: memref<1x128xf32, #tpu.memory_space<vmem>>, %arg6: memref<1x128xf32, #tpu.memory_space<vmem>>, %arg7: memref<1x1xf32, #tpu.memory_space<vmem>>) attributes {dimension_semantics = [#tpu.dimension_semantics<arbitrary>], iteration_bounds = array<i64: 1>, scalar_prefetch = 0 : i64, scratch_operands = 0 : i64, tpu.core_type = #tpu.core_type<tc>, window_params = [{transform_indices = @transform_0, window_bounds = array<i64: 8, 128>}, {pipeline_mode = #tpu.pipeline_mode<synchronous>, transform_indices = @transform_1, window_bounds = array<i64: 128, 128>}, {transform_indices = @transform_2, window_bounds = array<i64: 8, 1>}, {pipeline_mode = #tpu.pipeline_mode<synchronous>, transform_indices = @transform_3, window_bounds = array<i64: 1, 128>}, {pipeline_mode = #tpu.pipeline_mode<synchronous>, transform_indices = @transform_4, window_bounds = array<i64: 1, 128>}, {pipeline_mode = #tpu.pipeline_mode<synchronous>, transform_indices = @transform_5, window_bounds = array<i64: 1, 128>}, {pipeline_mode = #tpu.pipeline_mode<synchronous>, transform_indices = @transform_6, window_bounds = array<i64: 1, 1>}]} {
    %c0 = arith.constant 0 : index
    %c0_0 = arith.constant 0 : index
    %0 = vector.load %arg1[%c0, %c0_0] : memref<8x128xf32, #tpu.memory_space<vmem>>, vector<8x128xf32>
    %c0_1 = arith.constant 0 : index
    %c0_2 = arith.constant 0 : index
    %1 = vector.load %arg2[%c0_1, %c0_2] : memref<128x128xf32, #tpu.memory_space<vmem>>, vector<128x128xf32>
    %c0_3 = arith.constant 0 : index
    %c0_4 = arith.constant 0 : index
    %2 = vector.load %arg3[%c0_3, %c0_4] : memref<8x1xi32, #tpu.memory_space<vmem>>, vector<8x1xi32>
    %c0_5 = arith.constant 0 : index
    %c0_6 = arith.constant 0 : index
    %3 = vector.load %arg4[%c0_5, %c0_6] : memref<1x128xf32, #tpu.memory_space<vmem>>, vector<1x128xf32>
    %c0_7 = arith.constant 0 : index
    %c0_8 = arith.constant 0 : index
    %4 = vector.load %arg5[%c0_7, %c0_8] : memref<1x128xf32, #tpu.memory_space<vmem>>, vector<1x128xf32>
    %c0_9 = arith.constant 0 : index
    %c0_10 = arith.constant 0 : index
    %5 = vector.load %arg6[%c0_9, %c0_10] : memref<1x128xf32, #tpu.memory_space<vmem>>, vector<1x128xf32>
    %cst = arith.constant dense<0.000000e+00> : vector<8x128xf32>
    %6 = tpu.matmul %0, %1, %cst {dimension_numbers = #tpu.dot_dimension_numbers<[1], [0], [0], [1], [0, 0, 1, 1], [], []>} : vector<8x128xf32>, vector<128x128xf32>, vector<8x128xf32> -> vector<8x128xf32>
    %7 = arith.mulf %0, %0 : vector<8x128xf32>
    %cst_11 = arith.constant dense<0.000000e+00> : vector<8xf32>
    %8 = vector.multi_reduction <add>, %7, %cst_11 [1] : vector<8x128xf32> to vector<8xf32>
    %9 = vector.shape_cast %8 : vector<8xf32> to vector<8x1xf32>
    %cst_12 = arith.constant 1.000000e+00 : f32
    %10 = vector.broadcast %cst_12 : f32 to vector<1x128xf32>
    %11 = arith.addf %10, %3 : vector<1x128xf32>
    %12 = vector.broadcast %11 : vector<1x128xf32> to vector<8x128xf32>
    %13 = arith.mulf %6, %12 : vector<8x128xf32>
    %cst_13 = arith.constant 1.000000e+00 : f32
    %14 = vector.broadcast %cst_13 : f32 to vector<8x1xf32>
    %15 = arith.addf %14, %9 : vector<8x1xf32>
    %16 = vector.broadcast %3 : vector<1x128xf32> to vector<8x128xf32>
    %17 = vector.broadcast %15 : vector<8x1xf32> to vector<8x128xf32>
    %18 = arith.mulf %16, %17 : vector<8x128xf32>
    %19 = arith.subf %13, %18 : vector<8x128xf32>
    %20 = vector.broadcast %3 : vector<1x128xf32> to vector<8x128xf32>
    %21 = vector.broadcast %9 : vector<8x1xf32> to vector<8x128xf32>
    %22 = arith.mulf %20, %21 : vector<8x128xf32>
    %cst_14 = arith.constant 1.000000e+00 : f32
    %23 = vector.broadcast %cst_14 : f32 to vector<8x128xf32>
    %24 = arith.addf %23, %22 : vector<8x128xf32>
    %cst_15 = arith.constant 2.000000e+00 : f32
    %25 = vector.broadcast %cst_15 : f32 to vector<8x128xf32>
    %26 = arith.mulf %25, %6 : vector<8x128xf32>
    %27 = arith.subf %24, %26 : vector<8x128xf32>
    %28 = vector.broadcast %4 : vector<1x128xf32> to vector<8x128xf32>
    %29 = arith.mulf %28, %27 : vector<8x128xf32>
    %30 = math.rsqrt %29 : vector<8x128xf32>
    %31 = arith.mulf %19, %30 : vector<8x128xf32>
    %cst_16 = arith.constant -1.000000e+00 : f32
    %cst_17 = arith.constant 1.000000e+00 : f32
    %32 = vector.broadcast %cst_16 : f32 to vector<8x128xf32>
    %33 = arith.maximumf %32, %31 : vector<8x128xf32>
    %34 = vector.broadcast %cst_17 : f32 to vector<8x128xf32>
    %35 = arith.minimumf %34, %33 : vector<8x128xf32>
    %36 = math.absf %35 : vector<8x128xf32>
    %cst_18 = arith.constant -1.872930e-02 : f32
    %37 = vector.broadcast %cst_18 : f32 to vector<8x128xf32>
    %38 = arith.mulf %36, %37 : vector<8x128xf32>
    %cst_19 = arith.constant 7.426100e-02 : f32
    %39 = vector.broadcast %cst_19 : f32 to vector<8x128xf32>
    %40 = arith.addf %39, %38 : vector<8x128xf32>
    %41 = arith.mulf %36, %40 : vector<8x128xf32>
    %cst_20 = arith.constant -0.212114394 : f32
    %42 = vector.broadcast %cst_20 : f32 to vector<8x128xf32>
    %43 = arith.addf %42, %41 : vector<8x128xf32>
    %44 = arith.mulf %36, %43 : vector<8x128xf32>
    %cst_21 = arith.constant 1.57072878 : f32
    %45 = vector.broadcast %cst_21 : f32 to vector<8x128xf32>
    %46 = arith.addf %45, %44 : vector<8x128xf32>
    %cst_22 = arith.constant 1.000000e+00 : f32
    %47 = vector.broadcast %cst_22 : f32 to vector<8x128xf32>
    %48 = arith.subf %47, %36 : vector<8x128xf32>
    %49 = math.sqrt %48 : vector<8x128xf32>
    %50 = arith.mulf %49, %46 : vector<8x128xf32>
    %cst_23 = arith.constant 0.000000e+00 : f32
    %51 = vector.broadcast %cst_23 : f32 to vector<8x128xf32>
    %52 = arith.cmpf olt, %35, %51 : vector<8x128xf32>
    %cst_24 = arith.constant 3.14159274 : f32
    %53 = vector.broadcast %cst_24 : f32 to vector<8x128xf32>
    %54 = arith.subf %53, %50 : vector<8x128xf32>
    %55 = arith.select %52, %54, %50 : vector<8x128xi1>, vector<8x128xf32>
    %56 = vector.broadcast %5 : vector<1x128xf32> to vector<8x128xf32>
    %57 = arith.subf %55, %56 : vector<8x128xf32>
    %cst_25 = arith.constant 0.000000e+00 : f32
    %58 = vector.broadcast %cst_25 : f32 to vector<8x128xf32>
    %59 = arith.maximumf %58, %57 : vector<8x128xf32>
    %60 = tpu.iota {dimensions = array<i32: 1>} : vector<8x128xi32>
    %61 = vector.broadcast %2 : vector<8x1xi32> to vector<8x128xi32>
    %62 = arith.cmpi eq, %60, %61 : vector<8x128xi32>
    %cst_26 = arith.constant 1.000000e+00 : f32
    %63 = vector.broadcast %cst_26 : f32 to vector<8x128xf32>
    %64 = arith.subf %63, %59 : vector<8x128xf32>
    %cst_27 = arith.constant 0.000000e+00 : f32
    %65 = vector.broadcast %cst_27 : f32 to vector<8x128xf32>
    %66 = arith.maximumf %65, %64 : vector<8x128xf32>
    %67 = arith.select %62, %59, %66 : vector<8x128xi1>, vector<8x128xf32>
    %c8_i32 = arith.constant 8 : i32
    %68 = arith.muli %arg0, %c8_i32 : i32
    %69 = tpu.iota {dimensions = array<i32: 0>} : vector<8x1xi32>
    %70 = vector.broadcast %68 : i32 to vector<8x1xi32>
    %71 = arith.addi %70, %69 : vector<8x1xi32>
    %c4_i32 = arith.constant 4 : i32
    %72 = vector.broadcast %c4_i32 : i32 to vector<8x128xi32>
    %73 = arith.cmpi slt, %60, %72 : vector<8x128xi32>
    %c8_i32_28 = arith.constant 8 : i32
    %74 = vector.broadcast %c8_i32_28 : i32 to vector<8x1xi32>
    %75 = arith.cmpi slt, %71, %74 : vector<8x1xi32>
    %76 = vector.broadcast %75 : vector<8x1xi1> to vector<8x128xi1>
    %77 = arith.andi %73, %76 : vector<8x128xi1>
    %cst_29 = arith.constant 0.000000e+00 : f32
    %78 = vector.broadcast %cst_29 : f32 to vector<8x128xf32>
    %79 = arith.select %77, %67, %78 : vector<8x128xi1>, vector<8x128xf32>
    %80 = vector.shape_cast %79 : vector<8x128xf32> to vector<1x8x128xf32>
    %cst_30 = arith.constant dense<0.000000e+00> : vector<1xf32>
    %81 = vector.multi_reduction <add>, %80, %cst_30 [1, 2] : vector<1x8x128xf32> to vector<1xf32>
    %82 = vector.shape_cast %81 : vector<1xf32> to vector<1x1x1xf32>
    %83 = vector.extract %82[0, 0, 0] : f32 from vector<1x1x1xf32>
    %84 = vector.broadcast %83 : f32 to vector<1x1xf32>
    %c0_i32 = arith.constant 0 : i32
    %85 = arith.cmpi eq, %arg0, %c0_i32 : i32
    %86 = arith.extui %85 : i1 to i32
    %c0_i32_31 = arith.constant 0 : i32
    %87 = arith.cmpi ne, %86, %c0_i32_31 : i32
    scf.if %87 {
      %cst_36 = arith.constant 0.000000e+00 : f32
      %91 = vector.broadcast %cst_36 : f32 to vector<1x1xf32>
      %c0_37 = arith.constant 0 : index
      %c0_38 = arith.constant 0 : index
      %92 = vector.load %arg7[%c0_37, %c0_38] : memref<1x1xf32, #tpu.memory_space<vmem>>, vector<1x1xf32>
      tpu.vector_store %arg7[%c0_37, %c0_38], %91 {strides = array<i32>} : memref<1x1xf32, #tpu.memory_space<vmem>>, vector<1x1xf32>,
    } else {
    }
    %c0_32 = arith.constant 0 : index
    %c0_33 = arith.constant 0 : index
    %88 = vector.load %arg7[%c0_32, %c0_33] : memref<1x1xf32, #tpu.memory_space<vmem>>, vector<1x1xf32>
    %89 = arith.addf %88, %84 : vector<1x1xf32>
    %c0_34 = arith.constant 0 : index
    %c0_35 = arith.constant 0 : index
    %90 = vector.load %arg7[%c0_34, %c0_35] : memref<1x1xf32, #tpu.memory_space<vmem>>, vector<1x1xf32>
    tpu.vector_store %arg7[%c0_34, %c0_35], %89 {strides = array<i32>} : memref<1x1xf32, #tpu.memory_space<vmem>>, vector<1x1xf32>,
    return
  }
  func.func @transform_0(%arg0: i32) -> (i32, i32) {
    %c0_i32 = arith.constant 0 : i32
    %c0_i32_0 = arith.constant 0 : i32
    return %arg0, %c0_i32 : i32, i32
  }
  func.func @transform_1(%arg0: i32) -> (i32, i32) {
    %c0_i32 = arith.constant 0 : i32
    %c0_i32_0 = arith.constant 0 : i32
    %c0_i32_1 = arith.constant 0 : i32
    return %c0_i32, %c0_i32_0 : i32, i32
  }
  func.func @transform_2(%arg0: i32) -> (i32, i32) {
    %c0_i32 = arith.constant 0 : i32
    %c0_i32_0 = arith.constant 0 : i32
    return %arg0, %c0_i32 : i32, i32
  }
  func.func @transform_3(%arg0: i32) -> (i32, i32) {
    %c0_i32 = arith.constant 0 : i32
    %c0_i32_0 = arith.constant 0 : i32
    %c0_i32_1 = arith.constant 0 : i32
    return %c0_i32, %c0_i32_0 : i32, i32
  }
  func.func @transform_4(%arg0: i32) -> (i32, i32) {
    %c0_i32 = arith.constant 0 : i32
    %c0_i32_0 = arith.constant 0 : i32
    %c0_i32_1 = arith.constant 0 : i32
    return %c0_i32, %c0_i32_0 : i32, i32
  }
  func.func @transform_5(%arg0: i32) -> (i32, i32) {
    %c0_i32 = arith.constant 0 : i32
    %c0_i32_0 = arith.constant 0 : i32
    %c0_i32_1 = arith.constant 0 : i32
    return %c0_i32, %c0_i32_0 : i32, i32
  }
  func.func @transform_6(%arg0: i32) -> (i32, i32) {
    %c0_i32 = arith.constant 0 : i32
    %c0_i32_0 = arith.constant 0 : i32
    %c0_i32_1 = arith.constant 0 : i32
    return %c0_i32, %c0_i32_0 : i32, i32
  }
}

module attributes {stable_mosaic.version = 11 : i64} {
  func.func @_entailment_kernel(%arg0: i32, %arg1: memref<8x128xf32, #tpu.memory_space<vmem>>, %arg2: memref<128x128xf32, #tpu.memory_space<vmem>>, %arg3: memref<8x1xi32, #tpu.memory_space<vmem>>, %arg4: memref<1x128xf32, #tpu.memory_space<vmem>>, %arg5: memref<1x128xf32, #tpu.memory_space<vmem>>, %arg6: memref<1x128xf32, #tpu.memory_space<vmem>>, %arg7: memref<1x1xf32, #tpu.memory_space<vmem>>) attributes {dimension_semantics = [#tpu.dimension_semantics<arbitrary>], iteration_bounds = array<i64: 1>, scalar_prefetch = 0 : i64, scratch_operands = 0 : i64, tpu.core_type = #tpu.core_type<tc>, window_params = [{transform_indices = @transform_0, window_bounds = array<i64: 8, 128>}, {pipeline_mode = #tpu.pipeline_mode<synchronous>, transform_indices = @transform_1, window_bounds = array<i64: 128, 128>}, {transform_indices = @transform_2, window_bounds = array<i64: 8, 1>}, {pipeline_mode = #tpu.pipeline_mode<synchronous>, transform_indices = @transform_3, window_bounds = array<i64: 1, 128>}, {pipeline_mode = #tpu.pipeline_mode<synchronous>, transform_indices = @transform_4, window_bounds = array<i64: 1, 128>}, {pipeline_mode = #tpu.pipeline_mode<synchronous>, transform_indices = @transform_5, window_bounds = array<i64: 1, 128>}, {pipeline_mode = #tpu.pipeline_mode<synchronous>, transform_indices = @transform_6, window_bounds = array<i64: 1, 1>}]} {
    %c0 = arith.constant 0 : index
    %c0_0 = arith.constant 0 : index
    %0 = vector.load %arg1[%c0, %c0_0] : memref<8x128xf32, #tpu.memory_space<vmem>>, vector<8x128xf32>
    %c0_1 = arith.constant 0 : index
    %c0_2 = arith.constant 0 : index
    %1 = vector.load %arg2[%c0_1, %c0_2] : memref<128x128xf32, #tpu.memory_space<vmem>>, vector<128x128xf32>
    %c0_3 = arith.constant 0 : index
    %c0_4 = arith.constant 0 : index
    %2 = vector.load %arg3[%c0_3, %c0_4] : memref<8x1xi32, #tpu.memory_space<vmem>>, vector<8x1xi32>
    %c0_5 = arith.constant 0 : index
    %c0_6 = arith.constant 0 : index
    %3 = vector.load %arg4[%c0_5, %c0_6] : memref<1x128xf32, #tpu.memory_space<vmem>>, vector<1x128xf32>
    %c0_7 = arith.constant 0 : index
    %c0_8 = arith.constant 0 : index
    %4 = vector.load %arg5[%c0_7, %c0_8] : memref<1x128xf32, #tpu.memory_space<vmem>>, vector<1x128xf32>
    %c0_9 = arith.constant 0 : index
    %c0_10 = arith.constant 0 : index
    %5 = vector.load %arg6[%c0_9, %c0_10] : memref<1x128xf32, #tpu.memory_space<vmem>>, vector<1x128xf32>
    %cst = arith.constant dense<0.000000e+00> : vector<8x128xf32>
    %6 = tpu.matmul %0, %1, %cst {dimension_numbers = #tpu.dot_dimension_numbers<[1], [0], [0], [1], [0, 0, 1, 1], [], []>} : vector<8x128xf32>, vector<128x128xf32>, vector<8x128xf32> -> vector<8x128xf32>
    %7 = arith.mulf %0, %0 : vector<8x128xf32>
    %cst_11 = arith.constant dense<0.000000e+00> : vector<8xf32>
    %8 = vector.multi_reduction <add>, %7, %cst_11 [1] : vector<8x128xf32> to vector<8xf32>
    %9 = vector.shape_cast %8 : vector<8xf32> to vector<8x1xf32>
    %cst_12 = arith.constant 1.000000e+00 : f32
    %10 = vector.broadcast %cst_12 : f32 to vector<1x128xf32>
    %11 = arith.addf %10, %3 : vector<1x128xf32>
    %12 = vector.broadcast %11 : vector<1x128xf32> to vector<8x128xf32>
    %13 = arith.mulf %6, %12 : vector<8x128xf32>
    %cst_13 = arith.constant 1.000000e+00 : f32
    %14 = vector.broadcast %cst_13 : f32 to vector<8x1xf32>
    %15 = arith.addf %14, %9 : vector<8x1xf32>
    %16 = vector.broadcast %3 : vector<1x128xf32> to vector<8x128xf32>
    %17 = vector.broadcast %15 : vector<8x1xf32> to vector<8x128xf32>
    %18 = arith.mulf %16, %17 : vector<8x128xf32>
    %19 = arith.subf %13, %18 : vector<8x128xf32>
    %20 = vector.broadcast %3 : vector<1x128xf32> to vector<8x128xf32>
    %21 = vector.broadcast %9 : vector<8x1xf32> to vector<8x128xf32>
    %22 = arith.mulf %20, %21 : vector<8x128xf32>
    %cst_14 = arith.constant 1.000000e+00 : f32
    %23 = vector.broadcast %cst_14 : f32 to vector<8x128xf32>
    %24 = arith.addf %23, %22 : vector<8x128xf32>
    %cst_15 = arith.constant 2.000000e+00 : f32
    %25 = vector.broadcast %cst_15 : f32 to vector<8x128xf32>
    %26 = arith.mulf %25, %6 : vector<8x128xf32>
    %27 = arith.subf %24, %26 : vector<8x128xf32>
    %28 = vector.broadcast %4 : vector<1x128xf32> to vector<8x128xf32>
    %29 = arith.mulf %28, %27 : vector<8x128xf32>
    %30 = math.rsqrt %29 : vector<8x128xf32>
    %31 = arith.mulf %19, %30 : vector<8x128xf32>
    %cst_16 = arith.constant -1.000000e+00 : f32
    %cst_17 = arith.constant 1.000000e+00 : f32
    %32 = vector.broadcast %cst_16 : f32 to vector<8x128xf32>
    %33 = arith.maximumf %32, %31 : vector<8x128xf32>
    %34 = vector.broadcast %cst_17 : f32 to vector<8x128xf32>
    %35 = arith.minimumf %34, %33 : vector<8x128xf32>
    %36 = math.absf %35 : vector<8x128xf32>
    %cst_18 = arith.constant -1.872930e-02 : f32
    %37 = vector.broadcast %cst_18 : f32 to vector<8x128xf32>
    %38 = arith.mulf %36, %37 : vector<8x128xf32>
    %cst_19 = arith.constant 7.426100e-02 : f32
    %39 = vector.broadcast %cst_19 : f32 to vector<8x128xf32>
    %40 = arith.addf %39, %38 : vector<8x128xf32>
    %41 = arith.mulf %36, %40 : vector<8x128xf32>
    %cst_20 = arith.constant -0.212114394 : f32
    %42 = vector.broadcast %cst_20 : f32 to vector<8x128xf32>
    %43 = arith.addf %42, %41 : vector<8x128xf32>
    %44 = arith.mulf %36, %43 : vector<8x128xf32>
    %cst_21 = arith.constant 1.57072878 : f32
    %45 = vector.broadcast %cst_21 : f32 to vector<8x128xf32>
    %46 = arith.addf %45, %44 : vector<8x128xf32>
    %cst_22 = arith.constant 1.000000e+00 : f32
    %47 = vector.broadcast %cst_22 : f32 to vector<8x128xf32>
    %48 = arith.subf %47, %36 : vector<8x128xf32>
    %49 = math.sqrt %48 : vector<8x128xf32>
    %50 = arith.mulf %49, %46 : vector<8x128xf32>
    %cst_23 = arith.constant 0.000000e+00 : f32
    %51 = vector.broadcast %cst_23 : f32 to vector<8x128xf32>
    %52 = arith.cmpf olt, %35, %51 : vector<8x128xf32>
    %cst_24 = arith.constant 3.14159274 : f32
    %53 = vector.broadcast %cst_24 : f32 to vector<8x128xf32>
    %54 = arith.subf %53, %50 : vector<8x128xf32>
    %55 = arith.select %52, %54, %50 : vector<8x128xi1>, vector<8x128xf32>
    %56 = vector.broadcast %5 : vector<1x128xf32> to vector<8x128xf32>
    %57 = arith.subf %55, %56 : vector<8x128xf32>
    %cst_25 = arith.constant 0.000000e+00 : f32
    %58 = vector.broadcast %cst_25 : f32 to vector<8x128xf32>
    %59 = arith.maximumf %58, %57 : vector<8x128xf32>
    %60 = tpu.iota {dimensions = array<i32: 1>} : vector<8x128xi32>
    %61 = vector.broadcast %2 : vector<8x1xi32> to vector<8x128xi32>
    %62 = arith.cmpi eq, %60, %61 : vector<8x128xi32>
    %cst_26 = arith.constant 1.000000e+00 : f32
    %63 = vector.broadcast %cst_26 : f32 to vector<8x128xf32>
    %64 = arith.subf %63, %59 : vector<8x128xf32>
    %cst_27 = arith.constant 0.000000e+00 : f32
    %65 = vector.broadcast %cst_27 : f32 to vector<8x128xf32>
    %66 = arith.maximumf %65, %64 : vector<8x128xf32>
    %67 = arith.select %62, %59, %66 : vector<8x128xi1>, vector<8x128xf32>
    %c8_i32 = arith.constant 8 : i32
    %68 = arith.muli %arg0, %c8_i32 : i32
    %69 = tpu.iota {dimensions = array<i32: 0>} : vector<8x1xi32>
    %70 = vector.broadcast %68 : i32 to vector<8x1xi32>
    %71 = arith.addi %70, %69 : vector<8x1xi32>
    %c4_i32 = arith.constant 4 : i32
    %72 = vector.broadcast %c4_i32 : i32 to vector<8x128xi32>
    %73 = arith.cmpi slt, %60, %72 : vector<8x128xi32>
    %c8_i32_28 = arith.constant 8 : i32
    %74 = vector.broadcast %c8_i32_28 : i32 to vector<8x1xi32>
    %75 = arith.cmpi slt, %71, %74 : vector<8x1xi32>
    %76 = vector.broadcast %75 : vector<8x1xi1> to vector<8x128xi1>
    %77 = arith.andi %73, %76 : vector<8x128xi1>
    %cst_29 = arith.constant 0.000000e+00 : f32
    %78 = vector.broadcast %cst_29 : f32 to vector<8x128xf32>
    %79 = arith.select %77, %67, %78 : vector<8x128xi1>, vector<8x128xf32>
    %80 = vector.shape_cast %79 : vector<8x128xf32> to vector<1x8x128xf32>
    %cst_30 = arith.constant dense<0.000000e+00> : vector<1xf32>
    %81 = vector.multi_reduction <add>, %80, %cst_30 [1, 2] : vector<1x8x128xf32> to vector<1xf32>
    %82 = vector.shape_cast %81 : vector<1xf32> to vector<1x1x1xf32>
    %83 = vector.extract %82[0, 0, 0] : f32 from vector<1x1x1xf32>
    %84 = vector.broadcast %83 : f32 to vector<1x1xf32>
    %c0_i32 = arith.constant 0 : i32
    %85 = arith.cmpi eq, %arg0, %c0_i32 : i32
    %86 = arith.extui %85 : i1 to i32
    %c0_i32_31 = arith.constant 0 : i32
    %87 = arith.cmpi ne, %86, %c0_i32_31 : i32
    scf.if %87 {
      %cst_36 = arith.constant 0.000000e+00 : f32
      %91 = vector.broadcast %cst_36 : f32 to vector<1x1xf32>
      %c0_37 = arith.constant 0 : index
      %c0_38 = arith.constant 0 : index
      %92 = vector.load %arg7[%c0_37, %c0_38] : memref<1x1xf32, #tpu.memory_space<vmem>>, vector<1x1xf32>
      tpu.vector_store %arg7[%c0_37, %c0_38], %91 {strides = array<i32>} : memref<1x1xf32, #tpu.memory_space<vmem>>, vector<1x1xf32>,
    } else {
    }
    %c0_32 = arith.constant 0 : index
    %c0_33 = arith.constant 0 : index
    %88 = vector.load %arg7[%c0_32, %c0_33] : memref<1x1xf32, #tpu.memory_space<vmem>>, vector<1x1xf32>
    %89 = arith.addf %88, %84 : vector<1x1xf32>
    %c0_34 = arith.constant 0 : index
    %c0_35 = arith.constant 0 : index
    %90 = vector.load %arg7[%c0_34, %c0_35] : memref<1x1xf32, #tpu.memory_space<vmem>>, vector<1x1xf32>
    tpu.vector_store %arg7[%c0_34, %c0_35], %89 {strides = array<i32>} : memref<1x1xf32, #tpu.memory_space<vmem>>, vector<1x1xf32>,
    return
  }
  func.func @transform_0(%arg0: i32) -> (i32, i32) {
    %c0_i32 = arith.constant 0 : i32
    %c0_i32_0 = arith.constant 0 : i32
    return %arg0, %c0_i32 : i32, i32
  }
  func.func @transform_1(%arg0: i32) -> (i32, i32) {
    %c0_i32 = arith.constant 0 : i32
    %c0_i32_0 = arith.constant 0 : i32
    %c0_i32_1 = arith.constant 0 : i32
    return %c0_i32, %c0_i32_0 : i32, i32
  }
  func.func @transform_2(%arg0: i32) -> (i32, i32) {
    %c0_i32 = arith.constant 0 : i32
    %c0_i32_0 = arith.constant 0 : i32
    return %arg0, %c0_i32 : i32, i32
  }
  func.func @transform_3(%arg0: i32) -> (i32, i32) {
    %c0_i32 = arith.constant 0 : i32
    %c0_i32_0 = arith.constant 0 : i32
    %c0_i32_1 = arith.constant 0 : i32
    return %c0_i32, %c0_i32_0 : i32, i32
  }
  func.func @transform_4(%arg0: i32) -> (i32, i32) {
    %c0_i32 = arith.constant 0 : i32
    %c0_i32_0 = arith.constant 0 : i32
    %c0_i32_1 = arith.constant 0 : i32
    return %c0_i32, %c0_i32_0 : i32, i32
  }
  func.func @transform_5(%arg0: i32) -> (i32, i32) {
    %c0_i32 = arith.constant 0 : i32
    %c0_i32_0 = arith.constant 0 : i32
    %c0_i32_1 = arith.constant 0 : i32
    return %c0_i32, %c0_i32_0 : i32, i32
  }
  func.func @transform_6(%arg0: i32) -> (i32, i32) {
    %c0_i32 = arith.constant 0 : i32
    %c0_i32_0 = arith.constant 0 : i32
    %c0_i32_1 = arith.constant 0 : i32
    return %c0_i32, %c0_i32_0 : i32, i32
  }
}

</mosaic_0001>

<llo_original>
// kernel: tpu_custom_call.1
$region0: #{tpu_custom_call.1}
  #allocation0 [shape = 'u32[]', space=smem, size = 0x4, offset = 0x4, fixed_abs, tag = 'smem constant byte address 0x4 - core index']
  #allocation1 [shape = 'u32[144,128]{1,0:T(1,128)}', space=vmem, size = 0x12000, scoped, tag = 'internal scratch']
  %s0 = inlined_call_operand.vmem [shape: f32[8,128], index: 0, kind: input, shape index: {}]
  %s1 = inlined_call_operand.hbm [shape: f32[128,128], index: 1, kind: input, shape index: {}]
  %s2 = inlined_call_operand.vmem [shape: s32[8,1], index: 2, kind: input, shape index: {}]
  %s3 = inlined_call_operand.vmem [shape: f32[1,128], index: 3, kind: input, shape index: {}]
  %s4 = inlined_call_operand.vmem [shape: f32[1,128], index: 4, kind: input, shape index: {}]
  %s5 = inlined_call_operand.vmem [shape: f32[1,128], index: 5, kind: input, shape index: {}]
  %s6 = inlined_call_operand.hbm [shape: f32[1,1], index: 6, kind: output, shape index: {}]
  %s7 = sld [smem:[#allocation0]]
  $region42: #{tpu_custom_call.1} parent=0
    _
  %s9 = ssub.s32 1, %s7
  %s10 = scalar_select 0, %s9, %s7
  $region1: #{tpu_custom_call.1} parent=0
    #allocation2 [shape = 'u8[65536]{0}', space=vmem, size = 0x10000, scoped, tag = 'input window, operand 1, single buffered']
    #allocation3 [shape = 's32[1]{0}', space=sflag, size = 0x4, scoped, tag = 'scoped memory for tpu_custom_call.1']
    #allocation4 [shape = 's32[1]{0}', space=sflag, size = 0x4, scoped, tag = 'scoped memory for tpu_custom_call.1']
    #allocation5 [shape = 'u8[512]{0}', space=vmem, size = 0x400, scoped, tag = 'output window, operand 0, single buffered']
    %11 = vsyncpa [#allocation3], 0
    %12 = vsyncpa [#allocation4], 0
    // Predicated region
    $region2: #{tpu_custom_call.1} parent=1 // pred_check
      _
    $region3: #{tpu_custom_call.1} parent=1 // pred_check_branch
      %14 = sbr.rel (0) target = $region5
    $region4: #{tpu_custom_call.1} parent=1 // pred_region
      _
    $region5: #{tpu_custom_call.1} parent=1 // pred_fallthru
      _
    // Predicated region
    $region6: #{tpu_custom_call.1} parent=1 // pred_check
      _
    $region7: #{tpu_custom_call.1} parent=1 // pred_check_branch
      %16 = sbr.rel (0) target = $region9
    $region8: #{tpu_custom_call.1} parent=1 // pred_region
      %s18 = ssub.s32 2048, 2048
      %19 = vsyncadd [#allocation3], %s18
      %s20 = sshll.u32 [#allocation2], 4
      %s21 = int_to_ptr.vmem [resolvable:$true] %s20
      %26 = dma.hbm_to_vmem [thread:$0]  %s1, 2048, %s21, [#allocation3], 128, 128, 8
    $region9: #{tpu_custom_call.1} parent=1 // pred_fallthru
      _
    // Predicated region
    $region10: #{tpu_custom_call.1} parent=1 // pred_check
      _
    $region11: #{tpu_custom_call.1} parent=1 // pred_check_branch
      %28 = sbr.rel (0) target = $region13
    $region12: #{tpu_custom_call.1} parent=1 // pred_region
      _
    $region13: #{tpu_custom_call.1} parent=1 // pred_fallthru
      _
    // Predicated region
    $region14: #{tpu_custom_call.1} parent=1 // pred_check
      _
    $region15: #{tpu_custom_call.1} parent=1 // pred_check_branch
      %30 = sbr.rel (0) target = $region17
    $region16: #{tpu_custom_call.1} parent=1 // pred_region
      _
    $region17: #{tpu_custom_call.1} parent=1 // pred_fallthru
      _
    // Predicated region
    $region18: #{tpu_custom_call.1} parent=1 // pred_check
      _
    $region19: #{tpu_custom_call.1} parent=1 // pred_check_branch
      %32 = sbr.rel (0) target = $region21
    $region20: #{tpu_custom_call.1} parent=1 // pred_region
      _
    $region21: #{tpu_custom_call.1} parent=1 // pred_fallthru
      _
    // Predicated region
    $region22: #{tpu_custom_call.1} parent=1 // pred_check
      _
    $region23: #{tpu_custom_call.1} parent=1 // pred_check_branch
      %34 = sbr.rel (0) target = $region25
    $region24: #{tpu_custom_call.1} parent=1 // pred_region
      _
    $region25: #{tpu_custom_call.1} parent=1 // pred_fallthru
      _
    // Predicated region
    $region26: #{tpu_custom_call.1} parent=1 // pred_check
      _
    $region27: #{tpu_custom_call.1} parent=1 // pred_check_branch
      %36 = sbr.rel (0) target = $region29
    $region28: #{tpu_custom_call.1} parent=1 // pred_region
      %37 = dma.done [#allocation3], 2048
    $region29: #{tpu_custom_call.1} parent=1 // pred_fallthru
      _
    %v38 = vld [vmem:[%s0] sm:$0xff]
    %v39 = vld [vmem:[#allocation2] sm:$0xff]
    %v40 = vld [vmem:[#allocation2 + $0x8] sm:$0xff]
    %v41 = vld [vmem:[#allocation2 + $0x10] sm:$0xff]
    %v42 = vld [vmem:[#allocation2 + $0x18] sm:$0xff]
    %v43 = vld [vmem:[#allocation2 + $0x20] sm:$0xff]
    %v44 = vld [vmem:[#allocation2 + $0x28] sm:$0xff]
    %v45 = vld [vmem:[#allocation2 + $0x30] sm:$0xff]
    %v46 = vld [vmem:[#allocation2 + $0x38] sm:$0xff]
    %v47 = vld [vmem:[#allocation2 + $0x40] sm:$0xff]
    %v48 = vld [vmem:[#allocation2 + $0x48] sm:$0xff]
    %v49 = vld [vmem:[#allocation2 + $0x50] sm:$0xff]
    %v50 = vld [vmem:[#allocation2 + $0x58] sm:$0xff]
    %v51 = vld [vmem:[#allocation2 + $0x60] sm:$0xff]
    %v52 = vld [vmem:[#allocation2 + $0x68] sm:$0xff]
    %v53 = vld [vmem:[#allocation2 + $0x70] sm:$0xff]
    %v54 = vld [vmem:[#allocation2 + $0x78] sm:$0xff]
    %v55 = vld [vmem:[%s2] sm:$0xff]
    %v56 = vld [vmem:[%s3] sm:$0x1]
    %v57 = vld [vmem:[%s4] sm:$0x1]
    %v58 = vld [vmem:[%s5] sm:$0x1]
    %59 = vmatprep.subr.mxu0 0.0
    %60 = vmatpush1.msra.mxu0 %v39
    %61 = vmatprep.subr.mxu0 0.0
    %62 = vmatpush1.msra.mxu0 %v40
    %63 = vmatprep.subr.mxu0 0.0
    %64 = vmatpush1.msra.mxu0 %v41
    %65 = vmatprep.subr.mxu0 0.0
    %66 = vmatpush1.msra.mxu0 %v42
    %67 = vmatprep.subr.mxu0 0.0
    %68 = vmatpush1.msra.mxu0 %v43
    %69 = vmatprep.subr.mxu0 0.0
    %70 = vmatpush1.msra.mxu0 %v44
    %71 = vmatprep.subr.mxu0 0.0
    %72 = vmatpush1.msra.mxu0 %v45
    %73 = vmatprep.subr.mxu0 0.0
    %74 = vmatpush1.msra.mxu0 %v46
    %75 = vmatprep.subr.mxu0 0.0
    %76 = vmatpush1.msra.mxu0 %v47
    %77 = vmatprep.subr.mxu0 0.0
    %78 = vmatpush1.msra.mxu0 %v48
    %79 = vmatprep.subr.mxu0 0.0
    %80 = vmatpush1.msra.mxu0 %v49
    %81 = vmatprep.subr.mxu0 0.0
    %82 = vmatpush1.msra.mxu0 %v50
    %83 = vmatprep.subr.mxu0 0.0
    %84 = vmatpush1.msra.mxu0 %v51
    %85 = vmatprep.subr.mxu0 0.0
    %86 = vmatpush1.msra.mxu0 %v52
    %87 = vmatprep.subr.mxu0 0.0
    %88 = vmatpush1.msra.mxu0 %v53
    %89 = vmatprep.subr.mxu0 0.0
    %90 = vmatpush1.msra.mxu0 %v54
    %91 = vmatprep.subr.mxu0 0.0
    %92 = vmatpush1.msra.mxu0 0.0
    %93 = vmatprep.subr.mxu0 0.0
    %94 = vmatpush1.msra.mxu0 0.0
    %95 = vmatprep.subr.mxu0 0.0
    %96 = vmatpush1.msra.mxu0 0.0
    %97 = vmatprep.subr.mxu0 0.0
    %98 = vmatpush1.msra.mxu0 0.0
    %99 = vmatprep.subr.mxu0 0.0
    %100 = vmatpush1.msra.mxu0 0.0
    %101 = vmatprep.subr.mxu0 0.0
    %102 = vmatpush1.msra.mxu0 0.0
    %103 = vmatprep.subr.mxu0 0.0
    %104 = vmatpush1.msra.mxu0 0.0
    %105 = vmatprep.subr.mxu0 0.0
    %106 = vmatpush1.msra.mxu0 0.0
    %107 = vmatprep.subr.mxu0 0.0
    %108 = vmatpush1.msra.mxu0 0.0
    %109 = vmatprep.subr.mxu0 0.0
    %110 = vmatpush1.msra.mxu0 0.0
    %111 = vmatprep.subr.mxu0 0.0
    %112 = vmatpush1.msra.mxu0 0.0
    %113 = vmatprep.subr.mxu0 0.0
    %114 = vmatpush1.msra.mxu0 0.0
    %115 = vmatprep.subr.mxu0 0.0
    %116 = vmatpush1.msra.mxu0 0.0
    %117 = vmatprep.subr.mxu0 0.0
    %118 = vmatpush1.msra.mxu0 0.0
    %119 = vmatprep.subr.mxu0 0.0
    %120 = vmatpush1.msra.mxu0 0.0
    %121 = vmatprep.subr.mxu0 0.0
    %122 = vmatpush1.msra.mxu0 0.0
    %123 = vmatprep.mubr.f32.mxu0 0.0
    %124 = vmatmul.mubr.f32.gmra.mrb[0].mxu0 %v38
    %v125 = vpop.f32.mrb[0].mxu0
    %v126 = vadd.f32 0.0, %v125
    %v127 = vpop.f32.mrb[0].mxu0
    %128 = vdwg.mxu0
    %v129 = vmul.f32 %v38, %v38
    %130 = vadd.xlane.f32.xlu0 %v129
    %v131 = vpop.xlane.xlu0 %130
    %v132 = vadd.f32 %v56, 1.0
    %v134 = vlaneseq
    %v135 = vshrl.u32 %v134, 7
    %v136 = vsub.s32 0, %v135
    %v137 = vrot.slane %v132, %v136
    %v139 = vmul.f32 %v126, %v137
    %v140 = vadd.f32 %v131, 1.0
    %v142 = vlaneseq
    %v143 = vshrl.u32 %v142, 7
    %v144 = vsub.s32 0, %v143
    %v145 = vrot.slane %v56, %v144
    %v147 = vmul.f32 %v145, %v140
    %v148 = vsub.f32 %v139, %v147
    %v149 = vmul.f32 %v145, %v131
    %v150 = vadd.f32 %v149, 1.0
    %v151 = vmul.f32 %v126, 2.0
    %v152 = vsub.f32 %v150, %v151
    %v154 = vlaneseq
    %v155 = vshrl.u32 %v154, 7
    %v156 = vsub.s32 0, %v155
    %v157 = vrot.slane %v57, %v156
    %v159 = vmul.f32 %v157, %v152
    %v160 = vrsqrt.pop %v159
    %v161 = vmul.f32 %v148, %v160
    %v162 = vmax.f32 %v161, -1.0
    %v163 = vmin.f32 %v162, 1.0
    %v164 = vand.u32 2147483647, %v163
    %v165 = vmul.f32 %v164, -0.0187293
    %v166 = vadd.f32 %v165, 0.074261
    %v167 = vmul.f32 %v164, %v166
    %v168 = vadd.f32 %v167, -0.2121144
    %v169 = vmul.f32 %v164, %v168
    %v170 = vadd.f32 %v169, 1.5707288
    %v171 = vsub.f32 1.0, %v164
    %v172 = vrsqrt.pop %v171
    %v173 = vmul.f32 %v171, %v172
    %vm174 = vcmp.eq.f32.partialorder %v171, inf
    %v175 = vsel %vm174, %v171, %v173
    %vm176 = vcmp.eq.f32.partialorder %v171, 0.0
    %v177 = vand.u32 %v171, 2147483648
    %v178 = vsel %vm176, %v177, %v175
    %v179 = vmul.f32 %v178, %v170
    %vm180 = vcmp.lt.f32.partialorder %v163, 0.0
    %v181 = vsub.f32 3.1415927, %v179
    %v182 = vsel %vm180, %v181, %v179
    %v184 = vlaneseq
    %v185 = vshrl.u32 %v184, 7
    %v186 = vsub.s32 0, %v185
    %v187 = vrot.slane %v58, %v186
    %v189 = vsub.f32 %v182, %v187
    %v190 = vmax.f32 %v189, 0.0
    %v191 = vlaneseq
    %v192 = vand.u32 %v191, 127
    %193 = vset.pattern.permute.xlu0 0
    %194 = vperm.xlu0 %193, %v55
    %v195 = vpop.permute.xlu0 %194
    %vm196 = vcmp.eq.s32.totalorder %v192, %v195
    %v197 = vsub.f32 1.0, %v190
    %v198 = vmax.f32 %v197, 0.0
    %v199 = vsel %vm196, %v190, %v198
    %s200 = smul.u32 0, 8
    %v201 = vlaneseq
    %v202 = vshrl.u32 %v201, 7
    %v203 = vstv %s200
    %v204 = vadd.s32 %v203, %v202
    %vm205 = vcmp.lt.s32.totalorder %v192, 4
    %vm206 = vcmp.lt.s32.totalorder %v204, 8
    %v207 = vsel %vm206, 1, 0
    %vm208 = vcmp.eq.s32.totalorder %v207, 1
    %vm209 = vmand %vm205, %vm208
    %v210 = vsel %vm209, %v199, 0.0
    %211 = vadd.xlane.f32.xlu0 %v210
    %v212 = vpop.xlane.xlu0 %211
    %v213 = vrot.slane %v212, 4
    %v214 = vadd.f32 %v212, %v213
    %v215 = vrot.slane %v214, 2
    %v216 = vadd.f32 %v214, %v215
    %v217 = vrot.slane %v216, 1
    %v218 = vadd.f32 %v216, %v217
    %s219 = vtos %v218
    %v220 = vstv %s219
    %p221 = scmp.eq.s32.totalorder 0, 0
    // Predicated region
    $region30: #{tpu_custom_call.1} parent=1 // pred_check
      %p222 = pneg %p221
    $region31: #{tpu_custom_call.1} parent=1 // pred_check_branch
      %224 = sbr.rel (%p222) target = $region33
    $region32: #{tpu_custom_call.1} parent=1 // pred_region
      %vm225 = vcmask 0
      %226 = vst.msk [vmem:[#allocation5] sm:$0x1] %vm225, 0.0
    $region33: #{tpu_custom_call.1} parent=1 // pred_fallthru
      _
    %v227 = vld [vmem:[#allocation5] sm:$0x1]
    %v228 = vadd.f32 %v227, %v220
    %vm229 = vcmask 0
    %230 = vst.msk [vmem:[#allocation5] sm:$0x1] %vm229, %v228
    // Predicated region
    $region34: #{tpu_custom_call.1} parent=1 // pred_check
      _
    $region35: #{tpu_custom_call.1} parent=1 // pred_check_branch
      %232 = sbr.rel (0) target = $region37
    $region36: #{tpu_custom_call.1} parent=1 // pred_region
      %s234 = ssub.s32 16, 16
      %235 = vsyncadd [#allocation4], %s234
      %s237 = sshll.u32 [#allocation5], 4
      %s238 = int_to_ptr.vmem [resolvable:$true] %s237
      %240 = dma.vmem_to_hbm [thread:$0]  %s238, 16, %s6, [#allocation4]
    $region37: #{tpu_custom_call.1} parent=1 // pred_fallthru
      _
    // Predicated region
    $region38: #{tpu_custom_call.1} parent=1 // pred_check
      _
    $region39: #{tpu_custom_call.1} parent=1 // pred_check_branch
      %242 = sbr.rel (0) target = $region41
    $region40: #{tpu_custom_call.1} parent=1 // pred_region
      %243 = dma.done [#allocation4], 16
    $region41: #{tpu_custom_call.1} parent=1 // pred_fallthru
      _
    %244 = vsyncpa [#allocation3], 1
    %245 = vsyncpa [#allocation4], 1

// kernel: tpu_custom_call.1
$region0: #{tpu_custom_call.1}
  #allocation0 [shape = 'u32[]', space=smem, size = 0x4, offset = 0x4, fixed_abs, tag = 'smem constant byte address 0x4 - core index']
  #allocation1 [shape = 'u32[144,128]{1,0:T(1,128)}', space=vmem, size = 0x12000, scoped, tag = 'internal scratch']
  %s0 = inlined_call_operand.vmem [shape: f32[8,128], index: 0, kind: input, shape index: {}]
  %s1 = inlined_call_operand.hbm [shape: f32[128,128], index: 1, kind: input, shape index: {}]
  %s2 = inlined_call_operand.vmem [shape: s32[8,1], index: 2, kind: input, shape index: {}]
  %s3 = inlined_call_operand.vmem [shape: f32[1,128], index: 3, kind: input, shape index: {}]
  %s4 = inlined_call_operand.vmem [shape: f32[1,128], index: 4, kind: input, shape index: {}]
  %s5 = inlined_call_operand.vmem [shape: f32[1,128], index: 5, kind: input, shape index: {}]
  %s6 = inlined_call_operand.hbm [shape: f32[1,1], index: 6, kind: output, shape index: {}]
  %s7 = sld [smem:[#allocation0]]
  $region42: #{tpu_custom_call.1} parent=0
    _
  %s9 = ssub.s32 1, %s7
  %s10 = scalar_select 0, %s9, %s7
  $region1: #{tpu_custom_call.1} parent=0
    #allocation2 [shape = 'u8[65536]{0}', space=vmem, size = 0x10000, scoped, tag = 'input window, operand 1, single buffered']
    #allocation3 [shape = 's32[1]{0}', space=sflag, size = 0x4, scoped, tag = 'scoped memory for tpu_custom_call.1']
    #allocation4 [shape = 's32[1]{0}', space=sflag, size = 0x4, scoped, tag = 'scoped memory for tpu_custom_call.1']
    #allocation5 [shape = 'u8[512]{0}', space=vmem, size = 0x400, scoped, tag = 'output window, operand 0, single buffered']
    %11 = vsyncpa [#allocation3], 0
    %12 = vsyncpa [#allocation4], 0
    // Predicated region
    $region2: #{tpu_custom_call.1} parent=1 // pred_check
      _
    $region3: #{tpu_custom_call.1} parent=1 // pred_check_branch
      %14 = sbr.rel (0) target = $region5
    $region4: #{tpu_custom_call.1} parent=1 // pred_region
      _
    $region5: #{tpu_custom_call.1} parent=1 // pred_fallthru
      _
    // Predicated region
    $region6: #{tpu_custom_call.1} parent=1 // pred_check
      _
    $region7: #{tpu_custom_call.1} parent=1 // pred_check_branch
      %16 = sbr.rel (0) target = $region9
    $region8: #{tpu_custom_call.1} parent=1 // pred_region
      %s18 = ssub.s32 2048, 2048
      %19 = vsyncadd [#allocation3], %s18
      %s20 = sshll.u32 [#allocation2], 4
      %s21 = int_to_ptr.vmem [resolvable:$true] %s20
      %26 = dma.hbm_to_vmem [thread:$0]  %s1, 2048, %s21, [#allocation3], 128, 128, 8
    $region9: #{tpu_custom_call.1} parent=1 // pred_fallthru
      _
    // Predicated region
    $region10: #{tpu_custom_call.1} parent=1 // pred_check
      _
    $region11: #{tpu_custom_call.1} parent=1 // pred_check_branch
      %28 = sbr.rel (0) target = $region13
    $region12: #{tpu_custom_call.1} parent=1 // pred_region
      _
    $region13: #{tpu_custom_call.1} parent=1 // pred_fallthru
      _
    // Predicated region
    $region14: #{tpu_custom_call.1} parent=1 // pred_check
      _
    $region15: #{tpu_custom_call.1} parent=1 // pred_check_branch
      %30 = sbr.rel (0) target = $region17
    $region16: #{tpu_custom_call.1} parent=1 // pred_region
      _
    $region17: #{tpu_custom_call.1} parent=1 // pred_fallthru
      _
    // Predicated region
    $region18: #{tpu_custom_call.1} parent=1 // pred_check
      _
    $region19: #{tpu_custom_call.1} parent=1 // pred_check_branch
      %32 = sbr.rel (0) target = $region21
    $region20: #{tpu_custom_call.1} parent=1 // pred_region
      _
    $region21: #{tpu_custom_call.1} parent=1 // pred_fallthru
      _
    // Predicated region
    $region22: #{tpu_custom_call.1} parent=1 // pred_check
      _
    $region23: #{tpu_custom_call.1} parent=1 // pred_check_branch
      %34 = sbr.rel (0) target = $region25
    $region24: #{tpu_custom_call.1} parent=1 // pred_region
      _
    $region25: #{tpu_custom_call.1} parent=1 // pred_fallthru
      _
    // Predicated region
    $region26: #{tpu_custom_call.1} parent=1 // pred_check
      _
    $region27: #{tpu_custom_call.1} parent=1 // pred_check_branch
      %36 = sbr.rel (0) target = $region29
    $region28: #{tpu_custom_call.1} parent=1 // pred_region
      %37 = dma.done [#allocation3], 2048
    $region29: #{tpu_custom_call.1} parent=1 // pred_fallthru
      _
    %v38 = vld [vmem:[%s0] sm:$0xff]
    %v39 = vld [vmem:[#allocation2] sm:$0xff]
    %v40 = vld [vmem:[#allocation2 + $0x8] sm:$0xff]
    %v41 = vld [vmem:[#allocation2 + $0x10] sm:$0xff]
    %v42 = vld [vmem:[#allocation2 + $0x18] sm:$0xff]
    %v43 = vld [vmem:[#allocation2 + $0x20] sm:$0xff]
    %v44 = vld [vmem:[#allocation2 + $0x28] sm:$0xff]
    %v45 = vld [vmem:[#allocation2 + $0x30] sm:$0xff]
    %v46 = vld [vmem:[#allocation2 + $0x38] sm:$0xff]
    %v47 = vld [vmem:[#allocation2 + $0x40] sm:$0xff]
    %v48 = vld [vmem:[#allocation2 + $0x48] sm:$0xff]
    %v49 = vld [vmem:[#allocation2 + $0x50] sm:$0xff]
    %v50 = vld [vmem:[#allocation2 + $0x58] sm:$0xff]
    %v51 = vld [vmem:[#allocation2 + $0x60] sm:$0xff]
    %v52 = vld [vmem:[#allocation2 + $0x68] sm:$0xff]
    %v53 = vld [vmem:[#allocation2 + $0x70] sm:$0xff]
    %v54 = vld [vmem:[#allocation2 + $0x78] sm:$0xff]
    %v55 = vld [vmem:[%s2] sm:$0xff]
    %v56 = vld [vmem:[%s3] sm:$0x1]
    %v57 = vld [vmem:[%s4] sm:$0x1]
    %v58 = vld [vmem:[%s5] sm:$0x1]
    %59 = vmatprep.subr.mxu0 0.0
    %60 = vmatpush1.msra.mxu0 %v39
    %61 = vmatprep.subr.mxu0 0.0
    %62 = vmatpush1.msra.mxu0 %v40
    %63 = vmatprep.subr.mxu0 0.0
    %64 = vmatpush1.msra.mxu0 %v41
    %65 = vmatprep.subr.mxu0 0.0
    %66 = vmatpush1.msra.mxu0 %v42
    %67 = vmatprep.subr.mxu0 0.0
    %68 = vmatpush1.msra.mxu0 %v43
    %69 = vmatprep.subr.mxu0 0.0
    %70 = vmatpush1.msra.mxu0 %v44
    %71 = vmatprep.subr.mxu0 0.0
    %72 = vmatpush1.msra.mxu0 %v45
    %73 = vmatprep.subr.mxu0 0.0
    %74 = vmatpush1.msra.mxu0 %v46
    %75 = vmatprep.subr.mxu0 0.0
    %76 = vmatpush1.msra.mxu0 %v47
    %77 = vmatprep.subr.mxu0 0.0
    %78 = vmatpush1.msra.mxu0 %v48
    %79 = vmatprep.subr.mxu0 0.0
    %80 = vmatpush1.msra.mxu0 %v49
    %81 = vmatprep.subr.mxu0 0.0
    %82 = vmatpush1.msra.mxu0 %v50
    %83 = vmatprep.subr.mxu0 0.0
    %84 = vmatpush1.msra.mxu0 %v51
    %85 = vmatprep.subr.mxu0 0.0
    %86 = vmatpush1.msra.mxu0 %v52
    %87 = vmatprep.subr.mxu0 0.0
    %88 = vmatpush1.msra.mxu0 %v53
    %89 = vmatprep.subr.mxu0 0.0
    %90 = vmatpush1.msra.mxu0 %v54
    %91 = vmatprep.subr.mxu0 0.0
    %92 = vmatpush1.msra.mxu0 0.0
    %93 = vmatprep.subr.mxu0 0.0
    %94 = vmatpush1.msra.mxu0 0.0
    %95 = vmatprep.subr.mxu0 0.0
    %96 = vmatpush1.msra.mxu0 0.0
    %97 = vmatprep.subr.mxu0 0.0
    %98 = vmatpush1.msra.mxu0 0.0
    %99 = vmatprep.subr.mxu0 0.0
    %100 = vmatpush1.msra.mxu0 0.0
    %101 = vmatprep.subr.mxu0 0.0
    %102 = vmatpush1.msra.mxu0 0.0
    %103 = vmatprep.subr.mxu0 0.0
    %104 = vmatpush1.msra.mxu0 0.0
    %105 = vmatprep.subr.mxu0 0.0
    %106 = vmatpush1.msra.mxu0 0.0
    %107 = vmatprep.subr.mxu0 0.0
    %108 = vmatpush1.msra.mxu0 0.0
    %109 = vmatprep.subr.mxu0 0.0
    %110 = vmatpush1.msra.mxu0 0.0
    %111 = vmatprep.subr.mxu0 0.0
    %112 = vmatpush1.msra.mxu0 0.0
    %113 = vmatprep.subr.mxu0 0.0
    %114 = vmatpush1.msra.mxu0 0.0
    %115 = vmatprep.subr.mxu0 0.0
    %116 = vmatpush1.msra.mxu0 0.0
    %117 = vmatprep.subr.mxu0 0.0
    %118 = vmatpush1.msra.mxu0 0.0
    %119 = vmatprep.subr.mxu0 0.0
    %120 = vmatpush1.msra.mxu0 0.0
    %121 = vmatprep.subr.mxu0 0.0
    %122 = vmatpush1.msra.mxu0 0.0
    %123 = vmatprep.mubr.f32.mxu0 0.0
    %124 = vmatmul.mubr.f32.gmra.mrb[0].mxu0 %v38
    %v125 = vpop.f32.mrb[0].mxu0
    %v126 = vadd.f32 0.0, %v125
    %v127 = vpop.f32.mrb[0].mxu0
    %128 = vdwg.mxu0
    %v129 = vmul.f32 %v38, %v38
    %130 = vadd.xlane.f32.xlu0 %v129
    %v131 = vpop.xlane.xlu0 %130
    %v132 = vadd.f32 %v56, 1.0
    %v134 = vlaneseq
    %v135 = vshrl.u32 %v134, 7
    %v136 = vsub.s32 0, %v135
    %v137 = vrot.slane %v132, %v136
    %v139 = vmul.f32 %v126, %v137
    %v140 = vadd.f32 %v131, 1.0
    %v142 = vlaneseq
    %v143 = vshrl.u32 %v142, 7
    %v144 = vsub.s32 0, %v143
    %v145 = vrot.slane %v56, %v144
    %v147 = vmul.f32 %v145, %v140
    %v148 = vsub.f32 %v139, %v147
    %v149 = vmul.f32 %v145, %v131
    %v150 = vadd.f32 %v149, 1.0
    %v151 = vmul.f32 %v126, 2.0
    %v152 = vsub.f32 %v150, %v151
    %v154 = vlaneseq
    %v155 = vshrl.u32 %v154, 7
    %v156 = vsub.s32 0, %v155
    %v157 = vrot.slane %v57, %v156
    %v159 = vmul.f32 %v157, %v152
    %v160 = vrsqrt.pop %v159
    %v161 = vmul.f32 %v148, %v160
    %v162 = vmax.f32 %v161, -1.0
    %v163 = vmin.f32 %v162, 1.0
    %v164 = vand.u32 2147483647, %v163
    %v165 = vmul.f32 %v164, -0.0187293
    %v166 = vadd.f32 %v165, 0.074261
    %v167 = vmul.f32 %v164, %v166
    %v168 = vadd.f32 %v167, -0.2121144
    %v169 = vmul.f32 %v164, %v168
    %v170 = vadd.f32 %v169, 1.5707288
    %v171 = vsub.f32 1.0, %v164
    %v172 = vrsqrt.pop %v171
    %v173 = vmul.f32 %v171, %v172
    %vm174 = vcmp.eq.f32.partialorder %v171, inf
    %v175 = vsel %vm174, %v171, %v173
    %vm176 = vcmp.eq.f32.partialorder %v171, 0.0
    %v177 = vand.u32 %v171, 2147483648
    %v178 = vsel %vm176, %v177, %v175
    %v179 = vmul.f32 %v178, %v170
    %vm180 = vcmp.lt.f32.partialorder %v163, 0.0
    %v181 = vsub.f32 3.1415927, %v179
    %v182 = vsel %vm180, %v181, %v179
    %v184 = vlaneseq
    %v185 = vshrl.u32 %v184, 7
    %v186 = vsub.s32 0, %v185
    %v187 = vrot.slane %v58, %v186
    %v189 = vsub.f32 %v182, %v187
    %v190 = vmax.f32 %v189, 0.0
    %v191 = vlaneseq
    %v192 = vand.u32 %v191, 127
    %193 = vset.pattern.permute.xlu0 0
    %194 = vperm.xlu0 %193, %v55
    %v195 = vpop.permute.xlu0 %194
    %vm196 = vcmp.eq.s32.totalorder %v192, %v195
    %v197 = vsub.f32 1.0, %v190
    %v198 = vmax.f32 %v197, 0.0
    %v199 = vsel %vm196, %v190, %v198
    %s200 = smul.u32 0, 8
    %v201 = vlaneseq
    %v202 = vshrl.u32 %v201, 7
    %v203 = vstv %s200
    %v204 = vadd.s32 %v203, %v202
    %vm205 = vcmp.lt.s32.totalorder %v192, 4
    %vm206 = vcmp.lt.s32.totalorder %v204, 8
    %v207 = vsel %vm206, 1, 0
    %vm208 = vcmp.eq.s32.totalorder %v207, 1
    %vm209 = vmand %vm205, %vm208
    %v210 = vsel %vm209, %v199, 0.0
    %211 = vadd.xlane.f32.xlu0 %v210
    %v212 = vpop.xlane.xlu0 %211
    %v213 = vrot.slane %v212, 4
    %v214 = vadd.f32 %v212, %v213
    %v215 = vrot.slane %v214, 2
    %v216 = vadd.f32 %v214, %v215
    %v217 = vrot.slane %v216, 1
    %v218 = vadd.f32 %v216, %v217
    %s219 = vtos %v218
    %v220 = vstv %s219
    %p221 = scmp.eq.s32.totalorder 0, 0
    // Predicated region
    $region30: #{tpu_custom_call.1} parent=1 // pred_check
      %p222 = pneg %p221
    $region31: #{tpu_custom_call.1} parent=1 // pred_check_branch
      %224 = sbr.rel (%p222) target = $region33
    $region32: #{tpu_custom_call.1} parent=1 // pred_region
      %vm225 = vcmask 0
      %226 = vst.msk [vmem:[#allocation5] sm:$0x1] %vm225, 0.0
    $region33: #{tpu_custom_call.1} parent=1 // pred_fallthru
      _
    %v227 = vld [vmem:[#allocation5] sm:$0x1]
    %v228 = vadd.f32 %v227, %v220
    %vm229 = vcmask 0
    %230 = vst.msk [vmem:[#allocation5] sm:$0x1] %vm229, %v228
    // Predicated region
    $region34: #{tpu_custom_call.1} parent=1 // pred_check
      _
    $region35: #{tpu_custom_call.1} parent=1 // pred_check_branch
      %232 = sbr.rel (0) target = $region37
    $region36: #{tpu_custom_call.1} parent=1 // pred_region
      %s234 = ssub.s32 16, 16
      %235 = vsyncadd [#allocation4], %s234
      %s237 = sshll.u32 [#allocation5], 4
      %s238 = int_to_ptr.vmem [resolvable:$true] %s237
      %240 = dma.vmem_to_hbm [thread:$0]  %s238, 16, %s6, [#allocation4]
    $region37: #{tpu_custom_call.1} parent=1 // pred_fallthru
      _
    // Predicated region
    $region38: #{tpu_custom_call.1} parent=1 // pred_check
      _
    $region39: #{tpu_custom_call.1} parent=1 // pred_check_branch
      %242 = sbr.rel (0) target = $region41
    $region40: #{tpu_custom_call.1} parent=1 // pred_region
      %243 = dma.done [#allocation4], 16
    $region41: #{tpu_custom_call.1} parent=1 // pred_fallthru
      _
    %244 = vsyncpa [#allocation3], 1
    %245 = vsyncpa [#allocation4], 1

</llo_original>
